<compile_context>
chip_gen: v5e
topology: v5e:2x2
jax: 0.10.0
libtpu: 0.0.40
codegen_flags: <defaults>
</compile_context>

<pallas_src>
import math

import jax
import jax.numpy as jnp
from jax.experimental import pallas as pl
from jax.experimental.pallas import tpu as pltpu


def _add_fusion_kernel(rgb_ref, d_ref, out_ref):
    # Pure VPU elementwise hot path: (RGB + D) * 0.5 (== /2 exactly for floats).
    out_ref[...] = (rgb_ref[...] + d_ref[...]) * 0.5


def _sublane_quantum(dtype):
    # 8 for f32, 16 for bf16/f16, 32 for 1-byte dtypes (packed-sublane dtypes).
    itemsize = jnp.dtype(dtype).itemsize
    return max(8, 32 // itemsize)


def _round_up(x, m):
    return ((x + m - 1) // m) * m


def _chip_params():
    """(per-core VMEM bytes, TensorCores per chip) with conservative fallbacks."""
    vmem_cap = 64 << 20   # v7x per-TC VMEM — the smallest across generations.
    num_cores = 1
    try:
        info = pltpu.get_tpu_info()
        vmem_cap = int(getattr(info, "vmem_capacity_bytes", vmem_cap))
        for name in ("tensorcores_per_chip", "num_tensorcores", "num_cores",
                     "core_count"):
            v = getattr(info, name, None)
            if v:
                num_cores = int(v)
                break
        else:
            # Only v7x (64 MiB/TC VMEM) has 2 TensorCores per chip today.
            num_cores = 2 if vmem_cap <= (64 << 20) else 1
    except Exception:
        pass
    return vmem_cap, num_cores


def _pick_row_tile(rows, lane, itemsize, sub_q, target_block_bytes, num_cores):
    """Largest dtype-aligned sublane tile giving ~target_block_bytes blocks."""
    tr = max(sub_q, (target_block_bytes // (lane * itemsize)) // sub_q * sub_q)
    if tr >= rows:
        tr = rows  # full-extent block on the sublane axis (always legal)
    # Megacore (v7x only): guarantee >= 2 grid steps per TensorCore so each
    # core keeps input-prefetch / output-writeback overlap. Skipped on
    # single-core v5e / v6e where a split only adds ~0.35 us per extra step.
    if (num_cores >= 2 and pl.cdiv(rows, tr) < 2 * num_cores
            and rows >= 2 * num_cores * sub_q):
        tr = _round_up(pl.cdiv(rows, 2 * num_cores), sub_q)
    return tr


def _vmem_limit(block_bytes, vmem_cap):
    # 3 operands x 2 pipeline buffers + headroom for compiler-internal scratch;
    # never request the entire physical VMEM (cap at 48 MiB on 64 MiB v7x TCs).
    need = 6 * block_bytes + (8 << 20)
    cap = (48 << 20) if vmem_cap <= (64 << 20) else min(vmem_cap // 2, 96 << 20)
    return int(max(16 << 20, min(cap, need)))


def _fusion_2d(rgb2, d2, vmem_cap, num_cores):
    """Run the fusion kernel on a lane-dense (rows, lane) view."""
    rows, lane = rgb2.shape
    dtype = rgb2.dtype
    itemsize = jnp.dtype(dtype).itemsize
    sub_q = _sublane_quantum(dtype)

    # Bigger blocks amortize the ~0.35 us per-step overhead: ~4 MiB on v7x
    # (3.2 TB/s HBM, 64 MiB VMEM), ~8 MiB on v5e/v6e (128 MiB VMEM).
    target_block_bytes = (4 << 20) if vmem_cap <= (64 << 20) else (8 << 20)
    tr = _pick_row_tile(rows, lane, itemsize, sub_q, target_block_bytes,
                        num_cores)
    grid = (pl.cdiv(rows, tr),)
    block_bytes = tr * lane * itemsize

    return pl.pallas_call(
        _add_fusion_kernel,
        out_shape=jax.ShapeDtypeStruct((rows, lane), dtype),
        grid_spec=pltpu.PrefetchScalarGridSpec(
            num_scalar_prefetch=0,
            grid=grid,
            in_specs=[
                pl.BlockSpec((tr, lane), lambda i: (i, 0)),
                pl.BlockSpec((tr, lane), lambda i: (i, 0)),
            ],
            out_specs=pl.BlockSpec((tr, lane), lambda i: (i, 0)),
        ),
        compiler_params=pltpu.CompilerParams(
            dimension_semantics=("parallel",),
            vmem_limit_bytes=_vmem_limit(block_bytes, vmem_cap),
        ),
        cost_estimate=pl.CostEstimate(
            flops=2 * rows * lane,
            transcendentals=0,
            bytes_accessed=3 * rows * lane * itemsize,
        ),
    )(rgb2, d2)


def _pick_exact_lane(total, sub_q):
    """Widest lane (multiple of 128, <= 2048) dividing `total` exactly; prefer
    a view with >= sub_q sublane rows. Returns None if 128 doesn't divide."""
    fallback = None
    for cand in (2048, 1024, 512, 256, 128):
        if total % cand == 0:
            if total // cand >= sub_q:
                return cand
            if fallback is None:
                fallback = cand
    return fallback


def addmodel_forward(rgb, d, *, min_pallas_bytes=1 << 20):
    """Reproduces Addmodel.forward(RGB, D) -> (RGB, D, fusion)."""
    assert rgb.shape == d.shape and rgb.dtype == d.dtype
    shape = rgb.shape
    dtype = rgb.dtype

    # Integer inputs: torch's `/` is true division and returns float — keep
    # that semantic with plain jnp (corner case, not a perf path).
    if not jnp.issubdtype(dtype, jnp.floating):
        fusion = (rgb.astype(jnp.float32) + d.astype(jnp.float32)) * 0.5
        return rgb, d, fusion

    itemsize = jnp.dtype(dtype).itemsize
    total = math.prod(shape) if shape else 1

    # Small-input fast path: below ~1 MiB per operand the pallas_call launch,
    # per-step overhead and any wrapper-side relayout dominate; XLA's fused
    # add+mul is already at the HBM roofline.
    if total * itemsize < min_pallas_bytes or total < 128:
        fusion = (rgb + d) * 0.5
        return rgb, d, fusion

    sub_q = _sublane_quantum(dtype)
    vmem_cap, num_cores = _chip_params()

    # Direct path: trailing dim already lane-aligned -> collapse leading dims
    # (layout-preserving reshape, no relayout copy) and tile rows directly.
    if (len(shape) >= 2 and shape[-1] % 128 == 0
            and shape[-1] * itemsize <= (8 << 20)):
        lane = shape[-1]
        rows = total // lane
        fusion2 = _fusion_2d(rgb.reshape(rows, lane), d.reshape(rows, lane),
                             vmem_cap, num_cores)
        return rgb, d, fusion2.reshape(shape)

    # Flat path, element count divisible by 128: single reshape to a
    # lane-dense (rows, lane) slab — no padding, fully unmasked stores.
    lane = _pick_exact_lane(total, sub_q)
    if lane is not None:
        rows = total // lane
        fusion2 = _fusion_2d(rgb.reshape(rows, lane), d.reshape(rows, lane),
                             vmem_cap, num_cores)
        return rgb, d, fusion2.reshape(shape)

    # Ragged element count: run the 128-aligned prefix through the kernel and
    # finish the (<128 element) tail with plain jnp. No jnp.pad of both inputs
    # + output slice (that would nearly double HBM traffic on a memory-bound op).
    rgb_flat = rgb.reshape(-1)
    d_flat = d.reshape(-1)
    lane = 128
    rows = total // lane
    main = rows * lane
    main_out = _fusion_2d(rgb_flat[:main].reshape(rows, lane),
                          d_flat[:main].reshape(rows, lane),
                          vmem_cap, num_cores)
    tail_out = (rgb_flat[main:] + d_flat[main:]) * 0.5
    fusion = jnp.concatenate([main_out.reshape(-1), tail_out]).reshape(shape)
    return rgb, d, fusion


if __name__ == "__main__":
    # Addmodel has no learnable params; self.out_channels unused in forward.
    key = jax.random.PRNGKey(0)
    k1, k2 = jax.random.split(key)

    # Module-consistent small shape (N, C, H, W): tiny -> jnp fast path.
    shape = (2, 4, 16, 16)
    RGB = jax.random.normal(k1, shape, dtype=jnp.float32)
    D = jax.random.normal(k2, shape, dtype=jnp.float32)
    rgb_out, d_out, fusion = addmodel_forward(RGB, D)
    jax.block_until_ready(fusion)
    ref = (RGB + D) / 2.0
    assert jnp.allclose(fusion, ref, atol=1e-6), "fusion mismatch (fast path)"
    assert jnp.array_equal(rgb_out, RGB) and jnp.array_equal(d_out, D)

    # Force the Pallas kernel on the same small shape (exact-lane flat path).
    _, _, fusion_k = addmodel_forward(RGB, D, min_pallas_bytes=0)
    jax.block_until_ready(fusion_k)
    assert jnp.allclose(fusion_k, ref, atol=1e-6), "fusion mismatch (pallas path)"

    # Non-128-multiple element count -> aligned-prefix kernel + jnp tail path.
    shape2 = (1, 3, 14, 14)
    R2 = jax.random.normal(k1, shape2, dtype=jnp.float32)
    D2 = jax.random.normal(k2, shape2, dtype=jnp.float32)
    _, _, f2 = addmodel_forward(R2, D2, min_pallas_bytes=0)
    jax.block_until_ready(f2)
    assert jnp.allclose(f2, (R2 + D2) / 2.0, atol=1e-6), "fusion mismatch (ragged)"

    # Lane-aligned trailing dim -> direct 2-D tiling path (no flatten).
    shape3 = (2, 4, 8, 128)
    R3 = jax.random.normal(k1, shape3, dtype=jnp.float32)
    D3 = jax.random.normal(k2, shape3, dtype=jnp.float32)
    _, _, f3 = addmodel_forward(R3, D3, min_pallas_bytes=0)
    jax.block_until_ready(f3)
    assert jnp.allclose(f3, (R3 + D3) / 2.0, atol=1e-6), "fusion mismatch (direct)"

    print("KERNEL_OK")
</pallas_src>

<mosaic_0001>
module attributes {stable_mosaic.version = 11 : i64} {
  func.func @_add_fusion_kernel(%arg0: i32, %arg1: memref<8x256xf32, #tpu.memory_space<vmem>>, %arg2: memref<8x256xf32, #tpu.memory_space<vmem>>, %arg3: memref<8x256xf32, #tpu.memory_space<vmem>>) attributes {dimension_semantics = [#tpu.dimension_semantics<parallel>], iteration_bounds = array<i64: 1>, scalar_prefetch = 0 : i64, scratch_operands = 0 : i64, tpu.core_type = #tpu.core_type<tc>, window_params = [{transform_indices = @transform_0, window_bounds = array<i64: 8, 256>}, {transform_indices = @transform_1, window_bounds = array<i64: 8, 256>}, {transform_indices = @transform_2, window_bounds = array<i64: 8, 256>}]} {
    %c0 = arith.constant 0 : index
    %c0_0 = arith.constant 0 : index
    %0 = vector.load %arg1[%c0, %c0_0] : memref<8x256xf32, #tpu.memory_space<vmem>>, vector<8x256xf32>
    %c0_1 = arith.constant 0 : index
    %c0_2 = arith.constant 0 : index
    %1 = vector.load %arg2[%c0_1, %c0_2] : memref<8x256xf32, #tpu.memory_space<vmem>>, vector<8x256xf32>
    %2 = arith.addf %0, %1 : vector<8x256xf32>
    %cst = arith.constant 5.000000e-01 : f32
    %3 = vector.broadcast %cst : f32 to vector<8x256xf32>
    %4 = arith.mulf %2, %3 : vector<8x256xf32>
    %c0_3 = arith.constant 0 : index
    %c0_4 = arith.constant 0 : index
    %5 = vector.load %arg3[%c0_3, %c0_4] : memref<8x256xf32, #tpu.memory_space<vmem>>, vector<8x256xf32>
    tpu.vector_store %arg3[%c0_3, %c0_4], %4 {strides = array<i32>} : memref<8x256xf32, #tpu.memory_space<vmem>>, vector<8x256xf32>,
    return
  }
  func.func @transform_0(%arg0: i32) -> (i32, i32) {
    %c0_i32 = arith.constant 0 : i32
    %c0_i32_0 = arith.constant 0 : i32
    return %arg0, %c0_i32 : i32, i32
  }
  func.func @transform_1(%arg0: i32) -> (i32, i32) {
    %c0_i32 = arith.constant 0 : i32
    %c0_i32_0 = arith.constant 0 : i32
    return %arg0, %c0_i32 : i32, i32
  }
  func.func @transform_2(%arg0: i32) -> (i32, i32) {
    %c0_i32 = arith.constant 0 : i32
    %c0_i32_0 = arith.constant 0 : i32
    return %arg0, %c0_i32 : i32, i32
  }
}

</mosaic_0001>

<llo_original>
// kernel: tpu_custom_call.1
$region0: #{tpu_custom_call.1}
  #allocation0 [shape = 'u32[]', space=smem, size = 0x4, offset = 0x4, fixed_abs, tag = 'smem constant byte address 0x4 - core index']
  #allocation1 [shape = 'u32[72,128]{1,0:T(1,128)}', space=vmem, size = 0x9000, scoped, tag = 'internal scratch']
  %s0 = inlined_call_operand.hbm [shape: f32[8,256], index: 0, kind: input, shape index: {}]
  %s1 = inlined_call_operand.hbm [shape: f32[8,256], index: 1, kind: input, shape index: {}]
  %s2 = inlined_call_operand.hbm [shape: f32[8,256], index: 2, kind: output, shape index: {}]
  %s3 = sld [smem:[#allocation0]]
  $region26: #{tpu_custom_call.1} parent=0
    _
  %s5 = ssub.s32 1, %s3
  %s6 = scalar_select 0, %s5, %s3
  $region1: #{tpu_custom_call.1} parent=0
    #allocation2 [shape = 'u8[8192]{0}', space=vmem, size = 0x2000, scoped, tag = 'input window, operand 0, single buffered']
    #allocation3 [shape = 's32[1]{0}', space=sflag, size = 0x4, scoped, tag = 'scoped memory for tpu_custom_call.1']
    #allocation4 [shape = 's32[1]{0}', space=sflag, size = 0x4, scoped, tag = 'scoped memory for tpu_custom_call.1']
    #allocation5 [shape = 'u8[8192]{0}', space=vmem, size = 0x2000, scoped, tag = 'input window, operand 1, single buffered']
    #allocation6 [shape = 's32[1]{0}', space=sflag, size = 0x4, scoped, tag = 'scoped memory for tpu_custom_call.1']
    #allocation7 [shape = 'u8[8192]{0}', space=vmem, size = 0x2000, scoped, tag = 'output window, operand 0, single buffered']
    %7 = vsyncpa [#allocation3], 0
    %8 = vsyncpa [#allocation6], 0
    %9 = vsyncpa [#allocation4], 0
    // Predicated region
    $region2: #{tpu_custom_call.1} parent=1 // pred_check
      _
    $region3: #{tpu_custom_call.1} parent=1 // pred_check_branch
      %11 = sbr.rel (0) target = $region5
    $region4: #{tpu_custom_call.1} parent=1 // pred_region
      %13 = vsyncadd [#allocation3], 0
      %s15 = sshll.u32 %s0, 4
      %s16 = int_to_ptr.hbm [resolvable:$true] %s15
      %s17 = sshll.u32 [#allocation2], 4
      %s18 = int_to_ptr.vmem [resolvable:$true] %s17
      %20 = dma.hbm_to_vmem [thread:$0]  %s16, 256, %s18, [#allocation3]
    $region5: #{tpu_custom_call.1} parent=1 // pred_fallthru
      _
    // Predicated region
    $region6: #{tpu_custom_call.1} parent=1 // pred_check
      _
    $region7: #{tpu_custom_call.1} parent=1 // pred_check_branch
      %22 = sbr.rel (0) target = $region9
    $region8: #{tpu_custom_call.1} parent=1 // pred_region
      %24 = vsyncadd [#allocation6], 0
      %s26 = sshll.u32 %s1, 4
      %s27 = int_to_ptr.hbm [resolvable:$true] %s26
      %s28 = sshll.u32 [#allocation5], 4
      %s29 = int_to_ptr.vmem [resolvable:$true] %s28
      %31 = dma.hbm_to_vmem [thread:$0]  %s27, 256, %s29, [#allocation6]
    $region9: #{tpu_custom_call.1} parent=1 // pred_fallthru
      _
    // Predicated region
    $region10: #{tpu_custom_call.1} parent=1 // pred_check
      _
    $region11: #{tpu_custom_call.1} parent=1 // pred_check_branch
      %33 = sbr.rel (0) target = $region13
    $region12: #{tpu_custom_call.1} parent=1 // pred_region
      %35 = dma.done [#allocation3], 256
    $region13: #{tpu_custom_call.1} parent=1 // pred_fallthru
      _
    // Predicated region
    $region14: #{tpu_custom_call.1} parent=1 // pred_check
      _
    $region15: #{tpu_custom_call.1} parent=1 // pred_check_branch
      %37 = sbr.rel (0) target = $region17
    $region16: #{tpu_custom_call.1} parent=1 // pred_region
      %39 = dma.done [#allocation6], 256
    $region17: #{tpu_custom_call.1} parent=1 // pred_fallthru
      _
    %v40 = vld [vmem:[#allocation2] sm:$0xff]
    %v41 = vld [vmem:[#allocation2 + $0x8] sm:$0xff]
    %v42 = vld [vmem:[#allocation5] sm:$0xff]
    %v43 = vld [vmem:[#allocation5 + $0x8] sm:$0xff]
    %v44 = vadd.f32 %v40, %v42
    %v45 = vadd.f32 %v41, %v43
    %v46 = vmul.f32 %v44, 0.5
    %v47 = vmul.f32 %v45, 0.5
    %48 = vst [vmem:[#allocation7] sm:$0xff] %v46
    %49 = vst [vmem:[#allocation7 + $0x8] sm:$0xff] %v47
    // Predicated region
    $region18: #{tpu_custom_call.1} parent=1 // pred_check
      _
    $region19: #{tpu_custom_call.1} parent=1 // pred_check_branch
      %51 = sbr.rel (0) target = $region21
    $region20: #{tpu_custom_call.1} parent=1 // pred_region
      %53 = vsyncadd [#allocation4], 0
      %s55 = sshll.u32 [#allocation7], 4
      %s56 = int_to_ptr.vmem [resolvable:$true] %s55
      %s57 = sshll.u32 %s2, 4
      %s58 = int_to_ptr.hbm [resolvable:$true] %s57
      %60 = dma.vmem_to_hbm [thread:$0]  %s56, 256, %s58, [#allocation4]
    $region21: #{tpu_custom_call.1} parent=1 // pred_fallthru
      _
    // Predicated region
    $region22: #{tpu_custom_call.1} parent=1 // pred_check
      _
    $region23: #{tpu_custom_call.1} parent=1 // pred_check_branch
      %62 = sbr.rel (0) target = $region25
    $region24: #{tpu_custom_call.1} parent=1 // pred_region
      %64 = dma.done [#allocation4], 256
    $region25: #{tpu_custom_call.1} parent=1 // pred_fallthru
      _
    %65 = vsyncpa [#allocation3], 1
    %66 = vsyncpa [#allocation6], 1
    %67 = vsyncpa [#allocation4], 1

</llo_original>
